<compile_context>
chip_gen: v7x
topology: tpu7x:2x2x1
jax: 0.10.0
libtpu: 0.0.40
codegen_flags: <defaults>
</compile_context>

<pallas_src>
import functools

import jax
import jax.numpy as jnp
from jax.experimental import pallas as pl
from jax.experimental.pallas import tpu as pltpu


def _round_up(x, m):
    return ((x + m - 1) // m) * m


# --------------------------------------------------------------------------
# Pallas kernels
# --------------------------------------------------------------------------
def _xproj_kernel(x_ref, w_ref, b_ref, o_ref):
    # (tm, E) @ (E, 4H) on the MXU: bf16 operands, f32 accumulation, fused bias.
    y = jnp.dot(
        x_ref[...].astype(jnp.bfloat16),
        w_ref[...].astype(jnp.bfloat16),
        preferred_element_type=jnp.float32,
    )
    o_ref[...] = y + b_ref[...]


def _lstm_step_kernel(xp_ref, whh_ref, wfc_ref, bfc_ref, o_ref, h_ref, c_ref, *, hidden):
    # One LSTM time step per grid iteration (grid axis is sequential/"arbitrary").
    # h_ref / c_ref are VMEM scratch that persists across grid steps.
    t = pl.program_id(0)

    @pl.when(t == 0)
    def _():
        h_ref[...] = jnp.zeros_like(h_ref)
        c_ref[...] = jnp.zeros_like(c_ref)

    H = hidden
    # gates = x_t @ W_ih^T + b  (precomputed)  +  h_{t-1} @ W_hh^T
    gates = xp_ref[0] + jnp.dot(
        h_ref[...], whh_ref[...], preferred_element_type=jnp.float32
    )
    # PyTorch gate order: i, f, g, o
    i = jax.nn.sigmoid(gates[:, 0 * H:1 * H])
    f = jax.nn.sigmoid(gates[:, 1 * H:2 * H])
    g = jnp.tanh(gates[:, 2 * H:3 * H])
    o = jax.nn.sigmoid(gates[:, 3 * H:4 * H])

    c = f * c_ref[...] + i * g
    h = o * jnp.tanh(c)
    c_ref[...] = c
    h_ref[...] = h

    # Fused fc head: logits_t = h_t @ W_fc^T + b_fc  (written lane-dense (B, V)).
    logits = jnp.dot(h, wfc_ref[...], preferred_element_type=jnp.float32) + bfc_ref[...]
    o_ref[0] = logits.astype(o_ref.dtype)


# --------------------------------------------------------------------------
# Memoized pallas_call builders (one compile per shape signature)
# --------------------------------------------------------------------------
@functools.lru_cache(maxsize=None)
def _build_xproj(Mp, K, N, tm):
    return pl.pallas_call(
        _xproj_kernel,
        out_shape=jax.ShapeDtypeStruct((Mp, N), jnp.float32),
        grid=(Mp // tm,),
        in_specs=[
            pl.BlockSpec((tm, K), lambda i: (i, 0)),
            pl.BlockSpec((K, N), lambda i: (0, 0)),
            pl.BlockSpec((1, N), lambda i: (0, 0)),
        ],
        out_specs=pl.BlockSpec((tm, N), lambda i: (i, 0)),
        compiler_params=pltpu.CompilerParams(
            dimension_semantics=("parallel",),
        ),
    )


@functools.lru_cache(maxsize=None)
def _build_lstm(T, B, H, V):
    kernel = functools.partial(_lstm_step_kernel, hidden=H)
    return pl.pallas_call(
        kernel,
        out_shape=jax.ShapeDtypeStruct((T, B, V), jnp.float32),
        grid=(T,),
        in_specs=[
            pl.BlockSpec((1, B, 4 * H), lambda t: (t, 0, 0)),   # x-projection slab, per step
            pl.BlockSpec((H, 4 * H), lambda t: (0, 0)),         # W_hh^T (resident)
            pl.BlockSpec((H, V), lambda t: (0, 0)),             # W_fc^T (resident)
            pl.BlockSpec((1, V), lambda t: (0, 0)),             # b_fc (resident)
        ],
        out_specs=pl.BlockSpec((1, B, V), lambda t: (t, 0, 0)),
        scratch_shapes=[
            pltpu.VMEM((B, H), jnp.float32),   # h state
            pltpu.VMEM((B, H), jnp.float32),   # c state
        ],
        compiler_params=pltpu.CompilerParams(
            dimension_semantics=("arbitrary",),   # recurrence => sequential
        ),
    )


# --------------------------------------------------------------------------
# Parameters (deterministic; PyTorch-style init ranges, exact DecoderRNN shapes)
# --------------------------------------------------------------------------
def init_decoder_params(key, embed_size, hidden_size, vocab_size):
    ks = jax.random.split(key, 7)
    s = 1.0 / float(hidden_size) ** 0.5
    w_ih = jax.random.uniform(ks[0], (4 * hidden_size, embed_size), jnp.float32, -s, s)
    w_hh = jax.random.uniform(ks[1], (4 * hidden_size, hidden_size), jnp.float32, -s, s)
    b_ih = jax.random.uniform(ks[2], (4 * hidden_size,), jnp.float32, -s, s)
    b_hh = jax.random.uniform(ks[3], (4 * hidden_size,), jnp.float32, -s, s)
    w_fc = jax.random.uniform(ks[4], (vocab_size, hidden_size), jnp.float32, -s, s)
    b_fc = jax.random.uniform(ks[5], (vocab_size,), jnp.float32, -s, s)
    emb = jax.random.normal(ks[6], (vocab_size, embed_size), jnp.float32)
    return {
        "embedding": emb,                              # (V, E)
        "w_ih_t": w_ih.T,                              # (E, 4H), pre-transposed
        "w_hh_t": w_hh.T,                              # (H, 4H)
        "b_gates": (b_ih + b_hh).reshape(1, -1),       # (1, 4H)  b_ih + b_hh folded
        "w_fc_t": w_fc.T,                              # (H, V)
        "b_fc": b_fc.reshape(1, -1),                   # (1, V)
    }


# --------------------------------------------------------------------------
# DecoderRNN.forward — whole pass under a single jit
# --------------------------------------------------------------------------
@jax.jit
def decoder_rnn_forward(params, features, captions):
    """features: (B, E) float32; captions: (B, L) int32  ->  (B*L, V) logits."""
    B, E = features.shape
    H = params["w_hh_t"].shape[0]
    V = params["w_fc_t"].shape[1]

    # Embedding gather of captions[:, :-1] (data-dependent row gather; JAX glue
    # fused under this jit), then prepend the image feature as step 0.
    emb = jnp.take(params["embedding"], captions[:, :-1], axis=0)    # (B, L-1, E)
    x = jnp.concatenate([features[:, None, :], emb], axis=1)         # (B, T, E)
    T = x.shape[1]

    # Time-major layout so the recurrent kernel slices one (B, 4H) slab per step.
    xt = jnp.transpose(x, (1, 0, 2)).reshape(T * B, E)               # (T*B, E)

    # Batched input projection for all timesteps: one MXU GEMM.
    M = T * B
    tm = min(_round_up(M, 8), 256)
    Mp = _round_up(M, tm)
    if Mp != M:
        xt = jnp.pad(xt, ((0, Mp - M), (0, 0)))
    xproj = _build_xproj(Mp, E, 4 * H, tm)(xt, params["w_ih_t"], params["b_gates"])
    xproj = xproj[:M].reshape(T, B, 4 * H)

    # Sequential LSTM recurrence with the fc head fused into each step.
    logits_tbv = _build_lstm(T, B, H, V)(
        xproj, params["w_hh_t"], params["w_fc_t"], params["b_fc"]
    )                                                                # (T, B, V)

    # Match PyTorch: output (B, T, H) -> view(-1, H) -> fc  => rows ordered (b, t).
    return jnp.transpose(logits_tbv, (1, 0, 2)).reshape(B * T, V)


if __name__ == "__main__":
    key = jax.random.PRNGKey(0)
    kp, kf, kc = jax.random.split(key, 3)

    embed_size, hidden_size, vocab_size = 32, 32, 64
    B, L = 2, 8   # caption length 8 -> LSTM sequence length T = 8

    params = init_decoder_params(kp, embed_size, hidden_size, vocab_size)
    features = jax.random.normal(kf, (B, embed_size), jnp.float32)
    captions = jax.random.randint(kc, (B, L), 0, vocab_size, jnp.int32)

    out = decoder_rnn_forward(params, features, captions)
    out = jax.block_until_ready(out)

    assert out.shape == (B * L, vocab_size), out.shape
    assert bool(jnp.all(jnp.isfinite(out)))
    print("KERNEL_OK")
</pallas_src>

<mosaic_0001>
module attributes {stable_mosaic.version = 11 : i64} {
  func.func @_lstm_step_kernel(%arg0: i32, %arg1: memref<1x2x128xf32, #tpu.memory_space<vmem>>, %arg2: memref<32x128xf32, #tpu.memory_space<vmem>>, %arg3: memref<32x64xf32, #tpu.memory_space<vmem>>, %arg4: memref<1x64xf32, #tpu.memory_space<vmem>>, %arg5: memref<1x2x64xf32, #tpu.memory_space<vmem>>, %arg6: memref<2x32xf32, #tpu.memory_space<vmem>>, %arg7: memref<2x32xf32, #tpu.memory_space<vmem>>) attributes {dimension_semantics = [#tpu.dimension_semantics<arbitrary>], iteration_bounds = array<i64: 8>, scalar_prefetch = 0 : i64, scratch_operands = 2 : i64, tpu.core_type = #tpu.core_type<tc>, window_params = [{transform_indices = @transform_0, window_bounds = array<i64: 1, 2, 128>}, {pipeline_mode = #tpu.pipeline_mode<synchronous>, transform_indices = @transform_1, window_bounds = array<i64: 32, 128>}, {pipeline_mode = #tpu.pipeline_mode<synchronous>, transform_indices = @transform_2, window_bounds = array<i64: 32, 64>}, {pipeline_mode = #tpu.pipeline_mode<synchronous>, transform_indices = @transform_3, window_bounds = array<i64: 1, 64>}, {transform_indices = @transform_4, window_bounds = array<i64: 1, 2, 64>}]} {
    %c0_i32 = arith.constant 0 : i32
    %0 = arith.cmpi eq, %arg0, %c0_i32 : i32
    %1 = arith.extui %0 : i1 to i32
    %c0_i32_0 = arith.constant 0 : i32
    %2 = arith.cmpi ne, %1, %c0_i32_0 : i32
    scf.if %2 {
      %cst_24 = arith.constant 0.000000e+00 : f32
      %45 = vector.broadcast %cst_24 : f32 to vector<2x32xf32>
      %c0_25 = arith.constant 0 : index
      %c0_26 = arith.constant 0 : index
      %46 = vector.load %arg6[%c0_25, %c0_26] : memref<2x32xf32, #tpu.memory_space<vmem>>, vector<2x32xf32>
      tpu.vector_store %arg6[%c0_25, %c0_26], %45 {strides = array<i32>} : memref<2x32xf32, #tpu.memory_space<vmem>>, vector<2x32xf32>,
      %cst_27 = arith.constant 0.000000e+00 : f32
      %47 = vector.broadcast %cst_27 : f32 to vector<2x32xf32>
      %c0_28 = arith.constant 0 : index
      %c0_29 = arith.constant 0 : index
      %48 = vector.load %arg7[%c0_28, %c0_29] : memref<2x32xf32, #tpu.memory_space<vmem>>, vector<2x32xf32>
      tpu.vector_store %arg7[%c0_28, %c0_29], %47 {strides = array<i32>} : memref<2x32xf32, #tpu.memory_space<vmem>>, vector<2x32xf32>,
    } else {
    }
    %c0 = arith.constant 0 : index
    %c0_1 = arith.constant 0 : index
    %c0_2 = arith.constant 0 : index
    %3 = vector.load %arg1[%c0, %c0_1, %c0_2] : memref<1x2x128xf32, #tpu.memory_space<vmem>>, vector<1x2x128xf32>
    %4 = vector.shape_cast %3 : vector<1x2x128xf32> to vector<2x128xf32>
    %c0_3 = arith.constant 0 : index
    %c0_4 = arith.constant 0 : index
    %5 = vector.load %arg6[%c0_3, %c0_4] : memref<2x32xf32, #tpu.memory_space<vmem>>, vector<2x32xf32>
    %c0_5 = arith.constant 0 : index
    %c0_6 = arith.constant 0 : index
    %6 = vector.load %arg2[%c0_5, %c0_6] : memref<32x128xf32, #tpu.memory_space<vmem>>, vector<32x128xf32>
    %cst = arith.constant dense<0.000000e+00> : vector<2x128xf32>
    %7 = tpu.matmul %5, %6, %cst {dimension_numbers = #tpu.dot_dimension_numbers<[1], [0], [0], [1], [0, 0, 1, 1], [], []>} : vector<2x32xf32>, vector<32x128xf32>, vector<2x128xf32> -> vector<2x128xf32>
    %8 = arith.addf %4, %7 : vector<2x128xf32>
    %9 = vector.extract_strided_slice %8 {offsets = [0, 0], sizes = [2, 32], strides = [1, 1]} : vector<2x128xf32> to vector<2x32xf32>
    %10 = arith.negf %9 : vector<2x32xf32>
    %11 = math.exp %10 : vector<2x32xf32>
    %cst_7 = arith.constant 1.000000e+00 : f32
    %12 = vector.broadcast %cst_7 : f32 to vector<2x32xf32>
    %13 = arith.addf %12, %11 : vector<2x32xf32>
    %14 = arith.divf %12, %13 : vector<2x32xf32>
    %15 = vector.extract_strided_slice %8 {offsets = [0, 32], sizes = [2, 32], strides = [1, 1]} : vector<2x128xf32> to vector<2x32xf32>
    %16 = arith.negf %15 : vector<2x32xf32>
    %17 = math.exp %16 : vector<2x32xf32>
    %cst_8 = arith.constant 1.000000e+00 : f32
    %18 = vector.broadcast %cst_8 : f32 to vector<2x32xf32>
    %19 = arith.addf %18, %17 : vector<2x32xf32>
    %20 = arith.divf %18, %19 : vector<2x32xf32>
    %21 = vector.extract_strided_slice %8 {offsets = [0, 64], sizes = [2, 32], strides = [1, 1]} : vector<2x128xf32> to vector<2x32xf32>
    %22 = math.tanh %21 : vector<2x32xf32>
    %23 = vector.extract_strided_slice %8 {offsets = [0, 96], sizes = [2, 32], strides = [1, 1]} : vector<2x128xf32> to vector<2x32xf32>
    %24 = arith.negf %23 : vector<2x32xf32>
    %25 = math.exp %24 : vector<2x32xf32>
    %cst_9 = arith.constant 1.000000e+00 : f32
    %26 = vector.broadcast %cst_9 : f32 to vector<2x32xf32>
    %27 = arith.addf %26, %25 : vector<2x32xf32>
    %28 = arith.divf %26, %27 : vector<2x32xf32>
    %c0_10 = arith.constant 0 : index
    %c0_11 = arith.constant 0 : index
    %29 = vector.load %arg7[%c0_10, %c0_11] : memref<2x32xf32, #tpu.memory_space<vmem>>, vector<2x32xf32>
    %30 = arith.mulf %20, %29 : vector<2x32xf32>
    %31 = arith.mulf %14, %22 : vector<2x32xf32>
    %32 = arith.addf %30, %31 : vector<2x32xf32>
    %33 = math.tanh %32 : vector<2x32xf32>
    %34 = arith.mulf %28, %33 : vector<2x32xf32>
    %c0_12 = arith.constant 0 : index
    %c0_13 = arith.constant 0 : index
    %35 = vector.load %arg7[%c0_12, %c0_13] : memref<2x32xf32, #tpu.memory_space<vmem>>, vector<2x32xf32>
    tpu.vector_store %arg7[%c0_12, %c0_13], %32 {strides = array<i32>} : memref<2x32xf32, #tpu.memory_space<vmem>>, vector<2x32xf32>,
    %c0_14 = arith.constant 0 : index
    %c0_15 = arith.constant 0 : index
    %36 = vector.load %arg6[%c0_14, %c0_15] : memref<2x32xf32, #tpu.memory_space<vmem>>, vector<2x32xf32>
    tpu.vector_store %arg6[%c0_14, %c0_15], %34 {strides = array<i32>} : memref<2x32xf32, #tpu.memory_space<vmem>>, vector<2x32xf32>,
    %c0_16 = arith.constant 0 : index
    %c0_17 = arith.constant 0 : index
    %37 = vector.load %arg3[%c0_16, %c0_17] : memref<32x64xf32, #tpu.memory_space<vmem>>, vector<32x64xf32>
    %cst_18 = arith.constant dense<0.000000e+00> : vector<2x64xf32>
    %38 = tpu.matmul %34, %37, %cst_18 {dimension_numbers = #tpu.dot_dimension_numbers<[1], [0], [0], [1], [0, 0, 1, 1], [], []>} : vector<2x32xf32>, vector<32x64xf32>, vector<2x64xf32> -> vector<2x64xf32>
    %c0_19 = arith.constant 0 : index
    %c0_20 = arith.constant 0 : index
    %39 = vector.load %arg4[%c0_19, %c0_20] : memref<1x64xf32, #tpu.memory_space<vmem>>, vector<1x64xf32>
    %40 = vector.broadcast %39 : vector<1x64xf32> to vector<2x64xf32>
    %41 = arith.addf %38, %40 : vector<2x64xf32>
    %c0_21 = arith.constant 0 : index
    %c0_22 = arith.constant 0 : index
    %c0_23 = arith.constant 0 : index
    %42 = vector.load %arg5[%c0_21, %c0_22, %c0_23] : memref<1x2x64xf32, #tpu.memory_space<vmem>>, vector<1x2x64xf32>
    %43 = vector.shape_cast %42 : vector<1x2x64xf32> to vector<2x64xf32>
    %44 = vector.shape_cast %41 : vector<2x64xf32> to vector<1x2x64xf32>
    tpu.vector_store %arg5[%c0_21, %c0_22, %c0_23], %44 {strides = array<i32>} : memref<1x2x64xf32, #tpu.memory_space<vmem>>, vector<1x2x64xf32>,
    return
  }
  func.func @transform_0(%arg0: i32) -> (i32, i32, i32) {
    %c0_i32 = arith.constant 0 : i32
    %c0_i32_0 = arith.constant 0 : i32
    %c0_i32_1 = arith.constant 0 : i32
    return %arg0, %c0_i32, %c0_i32_0 : i32, i32, i32
  }
  func.func @transform_1(%arg0: i32) -> (i32, i32) {
    %c0_i32 = arith.constant 0 : i32
    %c0_i32_0 = arith.constant 0 : i32
    %c0_i32_1 = arith.constant 0 : i32
    return %c0_i32, %c0_i32_0 : i32, i32
  }
  func.func @transform_2(%arg0: i32) -> (i32, i32) {
    %c0_i32 = arith.constant 0 : i32
    %c0_i32_0 = arith.constant 0 : i32
    %c0_i32_1 = arith.constant 0 : i32
    return %c0_i32, %c0_i32_0 : i32, i32
  }
  func.func @transform_3(%arg0: i32) -> (i32, i32) {
    %c0_i32 = arith.constant 0 : i32
    %c0_i32_0 = arith.constant 0 : i32
    %c0_i32_1 = arith.constant 0 : i32
    return %c0_i32, %c0_i32_0 : i32, i32
  }
  func.func @transform_4(%arg0: i32) -> (i32, i32, i32) {
    %c0_i32 = arith.constant 0 : i32
    %c0_i32_0 = arith.constant 0 : i32
    %c0_i32_1 = arith.constant 0 : i32
    return %arg0, %c0_i32, %c0_i32_0 : i32, i32, i32
  }
}

module attributes {stable_mosaic.version = 11 : i64} {
  func.func @_xproj_kernel(%arg0: i32, %arg1: memref<16x32xf32, #tpu.memory_space<vmem>>, %arg2: memref<32x128xf32, #tpu.memory_space<vmem>>, %arg3: memref<1x128xf32, #tpu.memory_space<vmem>>, %arg4: memref<16x128xf32, #tpu.memory_space<vmem>>) attributes {dimension_semantics = [#tpu.dimension_semantics<parallel>], iteration_bounds = array<i64: 1>, scalar_prefetch = 0 : i64, scratch_operands = 0 : i64, tpu.core_type = #tpu.core_type<tc>, window_params = [{transform_indices = @transform_0, window_bounds = array<i64: 16, 32>}, {pipeline_mode = #tpu.pipeline_mode<synchronous>, transform_indices = @transform_1, window_bounds = array<i64: 32, 128>}, {pipeline_mode = #tpu.pipeline_mode<synchronous>, transform_indices = @transform_2, window_bounds = array<i64: 1, 128>}, {transform_indices = @transform_3, window_bounds = array<i64: 16, 128>}]} {
    %c0 = arith.constant 0 : index
    %c0_0 = arith.constant 0 : index
    %0 = vector.load %arg1[%c0, %c0_0] : memref<16x32xf32, #tpu.memory_space<vmem>>, vector<16x32xf32>
    %1 = arith.truncf %0 : vector<16x32xf32> to vector<16x32xbf16>
    %c0_1 = arith.constant 0 : index
    %c0_2 = arith.constant 0 : index
    %2 = vector.load %arg2[%c0_1, %c0_2] : memref<32x128xf32, #tpu.memory_space<vmem>>, vector<32x128xf32>
    %3 = arith.truncf %2 : vector<32x128xf32> to vector<32x128xbf16>
    %cst = arith.constant dense<0.000000e+00> : vector<16x128xf32>
    %4 = tpu.matmul %1, %3, %cst {dimension_numbers = #tpu.dot_dimension_numbers<[1], [0], [0], [1], [0, 0, 1, 1], [], []>} : vector<16x32xbf16>, vector<32x128xbf16>, vector<16x128xf32> -> vector<16x128xf32>
    %c0_3 = arith.constant 0 : index
    %c0_4 = arith.constant 0 : index
    %5 = vector.load %arg3[%c0_3, %c0_4] : memref<1x128xf32, #tpu.memory_space<vmem>>, vector<1x128xf32>
    %6 = vector.broadcast %5 : vector<1x128xf32> to vector<16x128xf32>
    %7 = arith.addf %4, %6 : vector<16x128xf32>
    %c0_5 = arith.constant 0 : index
    %c0_6 = arith.constant 0 : index
    %8 = vector.load %arg4[%c0_5, %c0_6] : memref<16x128xf32, #tpu.memory_space<vmem>>, vector<16x128xf32>
    tpu.vector_store %arg4[%c0_5, %c0_6], %7 {strides = array<i32>} : memref<16x128xf32, #tpu.memory_space<vmem>>, vector<16x128xf32>,
    return
  }
  func.func @transform_0(%arg0: i32) -> (i32, i32) {
    %c0_i32 = arith.constant 0 : i32
    %c0_i32_0 = arith.constant 0 : i32
    return %arg0, %c0_i32 : i32, i32
  }
  func.func @transform_1(%arg0: i32) -> (i32, i32) {
    %c0_i32 = arith.constant 0 : i32
    %c0_i32_0 = arith.constant 0 : i32
    %c0_i32_1 = arith.constant 0 : i32
    return %c0_i32, %c0_i32_0 : i32, i32
  }
  func.func @transform_2(%arg0: i32) -> (i32, i32) {
    %c0_i32 = arith.constant 0 : i32
    %c0_i32_0 = arith.constant 0 : i32
    %c0_i32_1 = arith.constant 0 : i32
    return %c0_i32, %c0_i32_0 : i32, i32
  }
  func.func @transform_3(%arg0: i32) -> (i32, i32) {
    %c0_i32 = arith.constant 0 : i32
    %c0_i32_0 = arith.constant 0 : i32
    return %arg0, %c0_i32 : i32, i32
  }
}

</mosaic_0001>

<llo_original>
// kernel: decoder_rnn_forward.2
$region0: #{decoder_rnn_forward.2}
  #allocation0 [shape = 'u32[]', space=smem, size = 0x4, offset = 0x4, fixed_abs, tag = 'smem constant byte address 0x4 - core index']
  #allocation1 [shape = 'u32[144,128]{1,0:T(1,128)}', space=vmem, size = 0x12000, scoped, tag = 'internal scratch']
  %s0 = inlined_call_operand.vmem [shape: f32[16,32], index: 0, kind: input, shape index: {}]
  %s1 = inlined_call_operand.vmem [shape: f32[32,128], index: 1, kind: input, shape index: {}]
  %s2 = inlined_call_operand.vmem [shape: f32[1,128], index: 2, kind: input, shape index: {}]
  %s3 = inlined_call_operand.vmem [shape: f32[16,128], index: 3, kind: output, shape index: {}]
  %s4 = sld [smem:[#allocation0]]
  $region22: #{decoder_rnn_forward.2} parent=0
    _
  %s6 = ssub.s32 1, %s4
  %s7 = scalar_select 0, %s6, %s4
  // Predicated region
  $region2: #{decoder_rnn_forward.2} parent=0 // pred_check
    _
  $region3: #{decoder_rnn_forward.2} parent=0 // pred_check_branch
    %9 = sbr.rel (0) target = $region5
  $region4: #{decoder_rnn_forward.2} parent=0 // pred_region
    _
  $region5: #{decoder_rnn_forward.2} parent=0 // pred_fallthru
    _
  // Predicated region
  $region6: #{decoder_rnn_forward.2} parent=0 // pred_check
    _
  $region7: #{decoder_rnn_forward.2} parent=0 // pred_check_branch
    %11 = sbr.rel (0) target = $region9
  $region8: #{decoder_rnn_forward.2} parent=0 // pred_region
    _
  $region9: #{decoder_rnn_forward.2} parent=0 // pred_fallthru
    _
  // Predicated region
  $region10: #{decoder_rnn_forward.2} parent=0 // pred_check
    _
  $region11: #{decoder_rnn_forward.2} parent=0 // pred_check_branch
    %13 = sbr.rel (0) target = $region13
  $region12: #{decoder_rnn_forward.2} parent=0 // pred_region
    _
  $region13: #{decoder_rnn_forward.2} parent=0 // pred_fallthru
    _
  %v15 = vld [vmem:[%s0] sm:$0xff]
  %v16 = vld [vmem:[%s0 + $0x8] sm:$0xff]
  %v17 = vpack.c.bf16 %v16, %v15
  %v18 = vld [vmem:[%s1] sm:$0xff]
  %v19 = vld [vmem:[%s1 + $0x8] sm:$0xff]
  %v20 = vld [vmem:[%s1 + $0x10] sm:$0xff]
  %v21 = vld [vmem:[%s1 + $0x18] sm:$0xff]
  %v22 = vpack.c.bf16 %v19, %v18
  %v23 = vpack.c.bf16 %v21, %v20
  %v24 = vld [vmem:[%s2] sm:$0x1]
  %v26 = vlaneseq
  %v27 = vshrl.u32 %v26, 7
  %v28 = vsub.s32 0, %v27
  %v29 = vrot.slane %v24, %v28
  %vm31 = vcmask 261120
  %v33 = vsel %vm31, %v17, 0
  %35 = vmatprep.subr.bf16.mxu0 0
  %36 = vmatpush1.bf16.msra.mxu0 %v22
  %37 = vmatprep.subr.bf16.mxu0 0
  %38 = vmatpush1.bf16.msra.mxu0 %v23
  %39 = vmatprep.subr.bf16.mxu0 0
  %40 = vmatpush1.bf16.msra.mxu0 0
  %41 = vmatprep.subr.bf16.mxu0 0
  %42 = vmatpush1.bf16.msra.mxu0 0
  %43 = vmatprep.subr.bf16.mxu0 0
  %44 = vmatpush1.bf16.msra.mxu0 0
  %45 = vmatprep.subr.bf16.mxu0 0
  %46 = vmatpush1.bf16.msra.mxu0 0
  %47 = vmatprep.subr.bf16.mxu0 0
  %48 = vmatpush1.bf16.msra.mxu0 0
  %49 = vmatprep.subr.bf16.mxu0 0
  %50 = vmatpush1.bf16.msra.mxu0 0
  %51 = vmatprep.subr.bf16.mxu0 0
  %52 = vmatpush1.bf16.msra.mxu0 0
  %53 = vmatprep.subr.bf16.mxu0 0
  %54 = vmatpush1.bf16.msra.mxu0 0
  %55 = vmatprep.subr.bf16.mxu0 0
  %56 = vmatpush1.bf16.msra.mxu0 0
  %57 = vmatprep.subr.bf16.mxu0 0
  %58 = vmatpush1.bf16.msra.mxu0 0
  %59 = vmatprep.subr.bf16.mxu0 0
  %60 = vmatpush1.bf16.msra.mxu0 0
  %61 = vmatprep.subr.bf16.mxu0 0
  %62 = vmatpush1.bf16.msra.mxu0 0
  %63 = vmatprep.subr.bf16.mxu0 0
  %64 = vmatpush1.bf16.msra.mxu0 0
  %65 = vmatprep.subr.bf16.mxu0 0
  %66 = vmatpush1.bf16.msra.mxu0 0
  %67 = vmatprep.mubr.bf16.mxu0 0
  %68 = vmatmul.mubr.bf16.gmra.mrb[0].mxu0 %v33
  %v69 = vpop.f32.mrb[0].mxu0
  %v70 = vadd.f32 %v29, %v69
  %v71 = vpop.f32.mrb[0].mxu0
  %v72 = vpop.f32.mrb[0].mxu0
  %v73 = vadd.f32 %v29, %v72
  %v74 = vpop.f32.mrb[0].mxu0
  %75 = vdwg.mxu0
  %76 = vst [vmem:[%s3] sm:$0xff] %v70
  %77 = vst [vmem:[%s3 + $0x8] sm:$0xff] %v73
  // Predicated region
  $region14: #{decoder_rnn_forward.2} parent=0 // pred_check
    _
  $region15: #{decoder_rnn_forward.2} parent=0 // pred_check_branch
    %79 = sbr.rel (0) target = $region17
  $region16: #{decoder_rnn_forward.2} parent=0 // pred_region
    _
  $region17: #{decoder_rnn_forward.2} parent=0 // pred_fallthru
    _
  // Predicated region
  $region18: #{decoder_rnn_forward.2} parent=0 // pred_check
    _
  $region19: #{decoder_rnn_forward.2} parent=0 // pred_check_branch
    %81 = sbr.rel (0) target = $region21
  $region20: #{decoder_rnn_forward.2} parent=0 // pred_region
    _
  $region21: #{decoder_rnn_forward.2} parent=0 // pred_fallthru
    _

// kernel: decoder_rnn_forward.3
$region0: #{decoder_rnn_forward.3}
  #allocation0 [shape = 'u32[]', space=smem, size = 0x4, offset = 0x4, fixed_abs, tag = 'smem constant byte address 0x4 - core index']
  #allocation1 [shape = 'u32[144,128]{1,0:T(1,128)}', space=vmem, size = 0x12000, scoped, tag = 'internal scratch']
  #allocation2 [shape = 'f32[2,32]{1,0:T(2,128)}', space=vmem, size = 0x400, scoped, tag = 'scratch operand']
  #allocation3 [shape = 'f32[2,32]{1,0:T(2,128)}', space=vmem, size = 0x400, scoped, tag = 'scratch operand']
  %s0 = inlined_call_operand.vmem [shape: f32[8,2,128], index: 0, kind: input, shape index: {}]
  %s1 = inlined_call_operand.vmem [shape: f32[32,128], index: 1, kind: input, shape index: {}]
  %s2 = inlined_call_operand.vmem [shape: f32[32,64], index: 2, kind: input, shape index: {}]
  %s3 = inlined_call_operand.vmem [shape: f32[1,64], index: 3, kind: input, shape index: {}]
  %s4 = inlined_call_operand.vmem [shape: f32[8,2,64], index: 4, kind: output, shape index: {}]
  %s5 = sld [smem:[#allocation0]]
  $region53: #{decoder_rnn_forward.3} parent=0
    _
  %s7 = ssub.s32 1, %s5
  %s8 = scalar_select 0, %s7, %s5
  loop: start=0, step=1, limit=10
  $region2: #{decoder_rnn_forward.3} parent=0 // loop_pre_header
    _
  $region3: #{decoder_rnn_forward.3} parent=0 // loop_header
    %s10 = sphi 0, %s14
    %p11 = scmp.ge.s32.totalorder %s10, 10
    %s20 = sphi 0, %s22
    %s23 = sphi 0, %s20
    %s24 = sphi 0, %s23
    %s40 = sphi 0, %s24
    %s44 = sphi 0, %s44
    %s46 = sphi 0, %s44
    %s47 = sphi 0, %s46
    %s61 = sphi 0, %s47
    %s65 = sphi 0, %s65
    %s67 = sphi 0, %s65
    %s68 = sphi 0, %s67
    %s82 = sphi 0, %s68
    %s86 = sphi 0, %s86
    %s88 = sphi 0, %s86
    %s89 = sphi 0, %s88
    %s103 = sphi 0, %s89
    %s109 = sphi 0, %s111
    %s112 = sphi 0, %s109
    %s113 = sphi 0, %s112
    %s129 = sphi 0, %s113
  $region4: #{decoder_rnn_forward.3} parent=0 // loop_header_branch
    %13 = sbr.rel (%p11) target = $region8
  $region5: #{decoder_rnn_forward.3} parent=0 // loop_body
    %s15 = ssub.s32 %s10, 1
    %s16 = ssub.s32 %s10, 2
    %s17 = sadd.s32 %s10, 1
    %s18 = ssub.s32 %s10, %s17
    %p19 = scmp.eq.s32.totalorder %s18, 0
    %s21 = sadd.s32 %s20, 1
    %s22 = scalar_select %p19, %s20, %s21
    %p25 = pneg %p19
    %p26 = scmp.eq.s32.totalorder %s10, 7
    %p27 = por %p25, %p26
    %p28 = scmp.ne.s32.totalorder %s20, %s23
    %p29 = scmp.eq.s32.totalorder %s10, 0
    %p30 = por %p28, %p29
    %p31 = scmp.ne.s32.totalorder %s20, %s23
    %p32 = scmp.eq.s32.totalorder %s15, 7
    %p33 = por %p31, %p32
    %p34 = scmp.ne.s32.totalorder %s23, %s24
    %p35 = scmp.eq.s32.totalorder %s15, 0
    %p36 = por %p34, %p35
    %p37 = scmp.ne.s32.totalorder %s23, %s24
    %p38 = scmp.eq.s32.totalorder %s16, 7
    %p39 = por %p37, %p38
    %p41 = scmp.ne.s32.totalorder %s24, %s40
    %p42 = scmp.eq.s32.totalorder %s16, 0
    %p43 = por %p41, %p42
    %s45 = sadd.s32 %s44, 1
    %p48 = scmp.eq.s32.totalorder %s10, 7
    %p49 = scmp.ne.s32.totalorder %s44, %s46
    %p50 = scmp.eq.s32.totalorder %s10, 0
    %p51 = por %p49, %p50
    %p52 = scmp.ne.s32.totalorder %s44, %s46
    %p53 = scmp.eq.s32.totalorder %s15, 7
    %p54 = por %p52, %p53
    %p55 = scmp.ne.s32.totalorder %s46, %s47
    %p56 = scmp.eq.s32.totalorder %s15, 0
    %p57 = por %p55, %p56
    %p58 = scmp.ne.s32.totalorder %s46, %s47
    %p59 = scmp.eq.s32.totalorder %s16, 7
    %p60 = por %p58, %p59
    %p62 = scmp.ne.s32.totalorder %s47, %s61
    %p63 = scmp.eq.s32.totalorder %s16, 0
    %p64 = por %p62, %p63
    %s66 = sadd.s32 %s65, 1
    %p69 = scmp.eq.s32.totalorder %s10, 7
    %p70 = scmp.ne.s32.totalorder %s65, %s67
    %p71 = scmp.eq.s32.totalorder %s10, 0
    %p72 = por %p70, %p71
    %p73 = scmp.ne.s32.totalorder %s65, %s67
    %p74 = scmp.eq.s32.totalorder %s15, 7
    %p75 = por %p73, %p74
    %p76 = scmp.ne.s32.totalorder %s67, %s68
    %p77 = scmp.eq.s32.totalorder %s15, 0
    %p78 = por %p76, %p77
    %p79 = scmp.ne.s32.totalorder %s67, %s68
    %p80 = scmp.eq.s32.totalorder %s16, 7
    %p81 = por %p79, %p80
    %p83 = scmp.ne.s32.totalorder %s68, %s82
    %p84 = scmp.eq.s32.totalorder %s16, 0
    %p85 = por %p83, %p84
    %s87 = sadd.s32 %s86, 1
    %p90 = scmp.eq.s32.totalorder %s10, 7
    %p91 = scmp.ne.s32.totalorder %s86, %s88
    %p92 = scmp.eq.s32.totalorder %s10, 0
    %p93 = por %p91, %p92
    %p94 = scmp.ne.s32.totalorder %s86, %s88
    %p95 = scmp.eq.s32.totalorder %s15, 7
    %p96 = por %p94, %p95
    %p97 = scmp.ne.s32.totalorder %s88, %s89
    %p98 = scmp.eq.s32.totalorder %s15, 0
    %p99 = por %p97, %p98
    %p100 = scmp.ne.s32.totalorder %s88, %s89
    %p101 = scmp.eq.s32.totalorder %s16, 7
    %p102 = por %p100, %p101
    %p104 = scmp.ne.s32.totalorder %s89, %s103
    %p105 = scmp.eq.s32.totalorder %s16, 0
    %p106 = por %p104, %p105
    %s107 = ssub.s32 %s10, %s17
    %p108 = scmp.eq.s32.totalorder %s107, 0
    %s110 = sadd.s32 %s109, 1
    %s111 = scalar_select %p108, %s109, %s110
    %p114 = pneg %p108
    %p115 = scmp.eq.s32.totalorder %s10, 7
    %p116 = por %p114, %p115
    %p117 = scmp.ne.s32.totalorder %s109, %s112
    %p118 = scmp.eq.s32.totalorder %s10, 0
    %p119 = por %p117, %p118
    %p120 = scmp.ne.s32.totalorder %s109, %s112
    %p121 = scmp.eq.s32.totalorder %s15, 7
    %p122 = por %p120, %p121
    %p123 = scmp.ne.s32.totalorder %s112, %s113
    %p124 = scmp.eq.s32.totalorder %s15, 0
    %p125 = por %p123, %p124
    %p126 = scmp.ne.s32.totalorder %s112, %s113
    %p127 = scmp.eq.s32.totalorder %s16, 7
    %p128 = por %p126, %p127
    %p130 = scmp.ne.s32.totalorder %s113, %s129
    %p131 = scmp.eq.s32.totalorder %s16, 0
    %p132 = por %p130, %p131
    %p133 = scmp.le.s32.totalorder 1, %s10
    %p134 = scmp.lt.s32.totalorder %s10, 9
    %p135 = pnand %p133, %p134
    %p136 = pneg %p135
    // Predicated region
    $region9: #{decoder_rnn_forward.3} parent=5 // pred_check
      _
    $region10: #{decoder_rnn_forward.3} parent=5 // pred_check_branch
      %138 = sbr.rel (%p135) target = $region12
    $region11: #{decoder_rnn_forward.3} parent=5 // pred_region
      %s139 = ssub.s32 %s10, 1
      // Predicated region
      $region13: #{decoder_rnn_forward.3} parent=11 // pred_check
        %p140 = pneg %p57
      $region14: #{decoder_rnn_forward.3} parent=11 // pred_check_branch
        %142 = sbr.rel (%p140) target = $region16
      $region15: #{decoder_rnn_forward.3} parent=11 // pred_region
        _
      $region16: #{decoder_rnn_forward.3} parent=11 // pred_fallthru
        _
      // Predicated region
      $region17: #{decoder_rnn_forward.3} parent=11 // pred_check
        %p143 = pneg %p78
      $region18: #{decoder_rnn_forward.3} parent=11 // pred_check_branch
        %145 = sbr.rel (%p143) target = $region20
      $region19: #{decoder_rnn_forward.3} parent=11 // pred_region
        _
      $region20: #{decoder_rnn_forward.3} parent=11 // pred_fallthru
        _
      // Predicated region
      $region21: #{decoder_rnn_forward.3} parent=11 // pred_check
        %p146 = pneg %p99
      $region22: #{decoder_rnn_forward.3} parent=11 // pred_check_branch
        %148 = sbr.rel (%p146) target = $region24
      $region23: #{decoder_rnn_forward.3} parent=11 // pred_region
        _
      $region24: #{decoder_rnn_forward.3} parent=11 // pred_fallthru
        _
    $region12: #{decoder_rnn_forward.3} parent=5 // pred_fallthru
      _
    %p149 = scmp.lt.s32.totalorder %s10, 8
    // Predicated region
    $region25: #{decoder_rnn_forward.3} parent=5 // pred_check
      %p150 = pneg %p149
    $region26: #{decoder_rnn_forward.3} parent=5 // pred_check_branch
      %152 = sbr.rel (%p150) target = $region28
    $region27: #{decoder_rnn_forward.3} parent=5 // pred_region
      // Predicated region
      $region29: #{decoder_rnn_forward.3} parent=27 // pred_check
        %p153 = pneg %p30
      $region30: #{decoder_rnn_forward.3} parent=27 // pred_check_branch
        %155 = sbr.rel (%p153) target = $region32
      $region31: #{decoder_rnn_forward.3} parent=27 // pred_region
        %p156 = scmp.lt.s32.totalorder %s10, 7
        %s157 = scalar_select %p156, %s10, 7
        %s158 = smul.addr %s157, 2
        %s159 = scalar_lea.vmem %s0, %s158
      $region32: #{decoder_rnn_forward.3} parent=27 // pred_fallthru
        _
    $region28: #{decoder_rnn_forward.3} parent=5 // pred_fallthru
      _
    %p160 = scmp.le.s32.totalorder 1, %s10
    %p161 = scmp.lt.s32.totalorder %s10, 9
    %p162 = pnand %p160, %p161
    %p163 = pneg %p162
    // Predicated region
    $region33: #{decoder_rnn_forward.3} parent=5 // pred_check
      _
    $region34: #{decoder_rnn_forward.3} parent=5 // pred_check_branch
      %165 = sbr.rel (%p162) target = $region36
    $region35: #{decoder_rnn_forward.3} parent=5 // pred_region
      %s166 = ssub.s32 %s10, 1
      %p167 = scmp.lt.s32.totalorder %s15, 7
      %s168 = scalar_select %p167, %s15, 7
      %s169 = smul.addr %s168, 2
      %s170 = scalar_lea.vmem %s0, %s169
      %p171 = pneg %p36
      %p172 = pneg %p33
      %p173 = pneg %p57
      %p174 = pneg %p54
      %p175 = pneg %p78
      %p176 = pneg %p75
      %p177 = pneg %p99
      %p178 = pneg %p96
      %p179 = pneg %p125
      %p180 = pneg %p122
      %p181 = scmp.lt.s32.totalorder %s15, 7
      %s182 = scalar_select %p181, %s15, 7
      %s183 = smul.addr %s182, 2
      %s184 = scalar_lea.vmem %s4, %s183
      %p185 = scmp.lt.s32.totalorder %s15, 7
      %s186 = scalar_select %p185, %s15, 7
      %s187 = smul.addr %s186, 2
      %s188 = scalar_lea.vmem %s0, %s187
      %p189 = scmp.lt.s32.totalorder %s15, 7
      %s190 = scalar_select %p189, %s15, 7
      %s191 = smul.addr %s190, 2
      %s192 = scalar_lea.vmem %s4, %s191
      %p193 = scmp.eq.s32.totalorder %s15, 0
      // Predicated region
      $region37: #{decoder_rnn_forward.3} parent=35 // pred_check
        %p194 = pneg %p193
      $region38: #{decoder_rnn_forward.3} parent=35 // pred_check_branch
        %196 = sbr.rel (%p194) target = $region40
      $region39: #{decoder_rnn_forward.3} parent=35 // pred_region
        %vm197 = vcmask 254976
        %198 = vst.msk [vmem:[#allocation2] sm:$0x3] %vm197, 0.0
        %199 = vst.msk [vmem:[#allocation3] sm:$0x3] %vm197, 0.0
      $region40: #{decoder_rnn_forward.3} parent=35 // pred_fallthru
        _
      %v200 = vld [vmem:[%s188] sm:$0x3]
      %v201 = vld [vmem:[#allocation2] sm:$0x3]
      %v202 = vld [vmem:[%s1] sm:$0xff]
      %v203 = vld [vmem:[%s1 + $0x8] sm:$0xff]
      %v204 = vld [vmem:[%s1 + $0x10] sm:$0xff]
      %v205 = vld [vmem:[%s1 + $0x18] sm:$0xff]
      %vm206 = vcmask 261120
      %v208 = vsel %vm206, %v201, 0
      %210 = vmatprep.subr.mxu0 0.0
      %211 = vmatpush1.msra.mxu0 %v202
      %212 = vmatprep.subr.mxu0 0.0
      %213 = vmatpush1.msra.mxu0 %v203
      %214 = vmatprep.subr.mxu0 0.0
      %215 = vmatpush1.msra.mxu0 %v204
      %216 = vmatprep.subr.mxu0 0.0
      %217 = vmatpush1.msra.mxu0 %v205
      %218 = vmatprep.subr.mxu0 0.0
      %219 = vmatpush1.msra.mxu0 0.0
      %220 = vmatprep.subr.mxu0 0.0
      %221 = vmatpush1.msra.mxu0 0.0
      %222 = vmatprep.subr.mxu0 0.0
      %223 = vmatpush1.msra.mxu0 0.0
      %224 = vmatprep.subr.mxu0 0.0
      %225 = vmatpush1.msra.mxu0 0.0
      %226 = vmatprep.subr.mxu0 0.0
      %227 = vmatpush1.msra.mxu0 0.0
      %228 = vmatprep.subr.mxu0 0.0
      %229 = vmatpush1.msra.mxu0 0.0
      %230 = vmatprep.subr.mxu0 0.0
      %231 = vmatpush1.msra.mxu0 0.0
      %232 = vmatprep.subr.mxu0 0.0
      %233 = vmatpush1.msra.mxu0 0.0
      %234 = vmatprep.subr.mxu0 0.0
      %235 = vmatpush1.msra.mxu0 0.0
      %236 = vmatprep.subr.mxu0 0.0
      %237 = vmatpush1.msra.mxu0 0.0
      %238 = vmatprep.subr.mxu0 0.0
      %239 = vmatpush1.msra.mxu0 0.0
      %240 = vmatprep.subr.mxu0 0.0
      %241 = vmatpush1.msra.mxu0 0.0
      %242 = vmatprep.subr.mxu0 0.0
      %243 = vmatpush1.msra.mxu0 0.0
      %244 = vmatprep.subr.mxu0 0.0
      %245 = vmatpush1.msra.mxu0 0.0
      %246 = vmatprep.subr.mxu0 0.0
      %247 = vmatpush1.msra.mxu0 0.0
      %248 = vmatprep.subr.mxu0 0.0
      %249 = vmatpush1.msra.mxu0 0.0
      %250 = vmatprep.subr.mxu0 0.0
      %251 = vmatpush1.msra.mxu0 0.0
      %252 = vmatprep.subr.mxu0 0.0
      %253 = vmatpush1.msra.mxu0 0.0
      %254 = vmatprep.subr.mxu0 0.0
      %255 = vmatpush1.msra.mxu0 0.0
      %256 = vmatprep.subr.mxu0 0.0
      %257 = vmatpush1.msra.mxu0 0.0
      %258 = vmatprep.subr.mxu0 0.0
      %259 = vmatpush1.msra.mxu0 0.0
      %260 = vmatprep.subr.mxu0 0.0
      %261 = vmatpush1.msra.mxu0 0.0
      %262 = vmatprep.subr.mxu0 0.0
      %263 = vmatpush1.msra.mxu0 0.0
      %264 = vmatprep.subr.mxu0 0.0
      %265 = vmatpush1.msra.mxu0 0.0
      %266 = vmatprep.subr.mxu0 0.0
      %267 = vmatpush1.msra.mxu0 0.0
      %268 = vmatprep.subr.mxu0 0.0
      %269 = vmatpush1.msra.mxu0 0.0
      %270 = vmatprep.subr.mxu0 0.0
      %271 = vmatpush1.msra.mxu0 0.0
      %272 = vmatprep.subr.mxu0 0.0
      %273 = vmatpush1.msra.mxu0 0.0
      %274 = vmatprep.mubr.f32.mxu0 0.0
      %275 = vmatmul.mubr.f32.gmra.mrb[0].mxu0 %v208
      %v276 = vpop.f32.mrb[0].mxu0
      %v277 = vadd.f32 0.0, %v276
      %v278 = vpop.f32.mrb[0].mxu0
      %279 = vdwg.mxu0
      %v280 = vadd.f32 %v200, %v277
      %v281 = vxor.u32 %v280, 2147483648
      %v282 = vmul.f32 %v281, 1.442695
      %v283 = vpow.pop %v282
      %v284 = vadd.f32 %v283, 1.0
      %v285 = vrcp.pop %v284
      %v286 = vmul.f32 1.0, %v285
      %v287 = vtanh.pop %v280
      %v288 = vld [vmem:[#allocation3] sm:$0x3]
      %290 = vrot.lane.b32.xlu0 %v288, 32
      %v291 = vpop.permute.xlu0 %290
      %v293 = vmul.f32 %v286, %v291
      %295 = vrot.lane.b32.xlu0 %v287, 64
      %v296 = vpop.permute.xlu0 %295
      %v298 = vmul.f32 %v286, %v296
      %300 = vrot.lane.b32.xlu0 %v298, 32
      %v301 = vpop.permute.xlu0 %300
      %v303 = vadd.f32 %v293, %v301
      %v304 = vtanh.pop %v303
      %306 = vrot.lane.b32.xlu0 %v304, 64
      %v307 = vpop.permute.xlu0 %306
      %v309 = vmul.f32 %v286, %v307
      %311 = vrot.lane.b32.xlu0 %v303, 96
      %v312 = vpop.permute.xlu0 %311
      %vm314 = vcmask 254976
      %315 = vst.msk [vmem:[#allocation3] sm:$0x3] %vm314, %v312
      %317 = vrot.lane.b32.xlu0 %v309, 32
      %v318 = vpop.permute.xlu0 %317
      %320 = vst.msk [vmem:[#allocation2] sm:$0x3] %vm314, %v318
      %v321 = vld [vmem:[%s2] sm:$0xff]
      %v322 = vld [vmem:[%s2 + $0x8] sm:$0xff]
      %v323 = vld [vmem:[%s2 + $0x10] sm:$0xff]
      %v324 = vld [vmem:[%s2 + $0x18] sm:$0xff]
      %v325 = vld [vmem:[%s3] sm:$0x1]
      %v327 = vlaneseq
      %v328 = vshrl.u32 %v327, 7
      %v329 = vsub.s32 0, %v328
      %v330 = vrot.slane %v325, %v329
      %v332 = vsel %vm206, %v318, 0
      %334 = vmatprep.subr.mxu0 0.0
      %335 = vmatpush1.msra.mxu0 %v321
      %336 = vmatprep.subr.mxu0 0.0
      %337 = vmatpush1.msra.mxu0 %v322
      %338 = vmatprep.subr.mxu0 0.0
      %339 = vmatpush1.msra.mxu0 %v323
      %340 = vmatprep.subr.mxu0 0.0
      %341 = vmatpush1.msra.mxu0 %v324
      %342 = vmatprep.subr.mxu0 0.0
      %343 = vmatpush1.msra.mxu0 0.0
      %344 = vmatprep.subr.mxu0 0.0
      %345 = vmatpush1.msra.mxu0 0.0
      %346 = vmatprep.subr.mxu0 0.0
      %347 = vmatpush1.msra.mxu0 0.0
      %348 = vmatprep.subr.mxu0 0.0
      %349 = vmatpush1.msra.mxu0 0.0
      %350 = vmatprep.subr.mxu0 0.0
      %351 = vmatpush1.msra.mxu0 0.0
      %352 = vmatprep.subr.mxu0 0.0
      %353 = vmatpush1.msra.mxu0 0.0
      %354 = vmatprep.subr.mxu0 0.0
      %355 = vmatpush1.msra.mxu0 0.0
      %356 = vmatprep.subr.mxu0 0.0
      %357 = vmatpush1.msra.mxu0 0.0
      %358 = vmatprep.subr.mxu0 0.0
      %359 = vmatpush1.msra.mxu0 0.0
      %360 = vmatprep.subr.mxu0 0.0
      %361 = vmatpush1.msra.mxu0 0.0
      %362 = vmatprep.subr.mxu0 0.0
      %363 = vmatpush1.msra.mxu0 0.0
      %364 = vmatprep.subr.mxu0 0.0
      %365 = vmatpush1.msra.mxu0 0.0
      %366 = vmatprep.subr.mxu0 0.0
      %367 = vmatpush1.msra.mxu0 0.0
      %368 = vmatprep.subr.mxu0 0.0
      %369 = vmatpush1.msra.mxu0 0.0
      %370 = vmatprep.subr.mxu0 0.0
      %371 = vmatpush1.msra.mxu0 0.0
      %372 = vmatprep.subr.mxu0 0.0
      %373 = vmatpush1.msra.mxu0 0.0
      %374 = vmatprep.subr.mxu0 0.0
      %375 = vmatpush1.msra.mxu0 0.0
      %376 = vmatprep.subr.mxu0 0.0
      %377 = vmatpush1.msra.mxu0 0.0
      %378 = vmatprep.subr.mxu0 0.0
      %379 = vmatpush1.msra.mxu0 0.0
      %380 = vmatprep.subr.mxu0 0.0
      %381 = vmatpush1.msra.mxu0 0.0
      %382 = vmatprep.subr.mxu0 0.0
      %383 = vmatpush1.msra.mxu0 0.0
      %384 = vmatprep.subr.mxu0 0.0
      %385 = vmatpush1.msra.mxu0 0.0
      %386 = vmatprep.subr.mxu0 0.0
      %387 = vmatpush1.msra.mxu0 0.0
      %388 = vmatprep.subr.mxu0 0.0
      %389 = vmatpush1.msra.mxu0 0.0
      %390 = vmatprep.subr.mxu0 0.0
      %391 = vmatpush1.msra.mxu0 0.0
      %392 = vmatprep.subr.mxu0 0.0
      %393 = vmatpush1.msra.mxu0 0.0
      %394 = vmatprep.subr.mxu0 0.0
      %395 = vmatpush1.msra.mxu0 0.0
      %396 = vmatprep.subr.mxu0 0.0
      %397 = vmatpush1.msra.mxu0 0.0
      %398 = vmatprep.mubr.f32.mxu0 0.0
      %399 = vmatmul.mubr.f32.gmra.mrb[0].mxu0 %v332
      %v400 = vpop.f32.mrb[0].mxu0
      %v401 = vadd.f32 %v330, %v400
      %v402 = vpop.f32.mrb[0].mxu0
      %403 = vdwg.mxu0
      %vm404 = vcmask 517120
      %405 = vst.msk [vmem:[%s192] sm:$0x3] %vm404, %v401
      %p406 = scmp.lt.s32.totalorder %s15, 7
      %s407 = scalar_select %p406, %s15, 7
      %s408 = smul.addr %s407, 2
      %s409 = scalar_lea.vmem %s4, %s408
      // Predicated region
      $region41: #{decoder_rnn_forward.3} parent=35 // pred_check
        %p410 = pneg %p122
      $region42: #{decoder_rnn_forward.3} parent=35 // pred_check_branch
        %412 = sbr.rel (%p410) target = $region44
      $region43: #{decoder_rnn_forward.3} parent=35 // pred_region
        _
      $region44: #{decoder_rnn_forward.3} parent=35 // pred_fallthru
        _
    $region36: #{decoder_rnn_forward.3} parent=5 // pred_fallthru
      _
    %p413 = scmp.le.s32.totalorder 2, %s10
    // Predicated region
    $region45: #{decoder_rnn_forward.3} parent=5 // pred_check
      %p414 = pneg %p413
    $region46: #{decoder_rnn_forward.3} parent=5 // pred_check_branch
      %416 = sbr.rel (%p414) target = $region48
    $region47: #{decoder_rnn_forward.3} parent=5 // pred_region
      %s417 = ssub.s32 %s10, 2
      // Predicated region
      $region49: #{decoder_rnn_forward.3} parent=47 // pred_check
        %p418 = pneg %p128
      $region50: #{decoder_rnn_forward.3} parent=47 // pred_check_branch
        %420 = sbr.rel (%p418) target = $region52
      $region51: #{decoder_rnn_forward.3} parent=47 // pred_region
        %p421 = scmp.lt.s32.totalorder %s16, 7
        %s422 = scalar_select %p421, %s16, 7
        %s423 = smul.addr %s422, 2
        %s424 = scalar_lea.vmem %s4, %s423
      $region52: #{decoder_rnn_forward.3} parent=47 // pred_fallthru
        _
    $region48: #{decoder_rnn_forward.3} parent=5 // pred_fallthru
      _
  $region6: #{decoder_rnn_forward.3} parent=0 // loop_footer
    %s14 = sadd.s32 1, %s10
  $region7: #{decoder_rnn_forward.3} parent=0 // loop_footer_branch
    %9 = sbr.rel target = $region3
  $region8: #{decoder_rnn_forward.3} parent=0 // loop_exit
    _

</llo_original>
